<compile_context>
chip_gen: v6e
topology: v6e:2x2x1
jax: 0.10.0
libtpu: 0.0.40
codegen_flags: <defaults>
</compile_context>

<pallas_src>
import functools

import jax
import jax.numpy as jnp
from jax import lax
from jax.experimental import pallas as pl
from jax.experimental.pallas import tpu as pltpu


def _round_up(x, m):
    return (x + m - 1) // m * m


def _pow(v, gamma):
    """jnp.power(v, gamma) with cheap VPU paths for small integer gammas."""
    if gamma == 0.0:
        return jnp.ones_like(v)
    if float(gamma).is_integer() and 1.0 <= gamma <= 8.0:
        r = v
        for _ in range(int(gamma) - 1):
            r = r * v
        return r
    return jnp.power(v, jnp.float32(gamma))   # exp(gamma*log(v)) fallback


def _focal_loss_kernel(preds_ref, labels_ref, out_ref, acc_ref, *,
                       alpha, gamma, n, rows_per_tile, chunk_rows,
                       steps_per_split, may_need_mask, approx_reciprocal):
    c = pl.program_id(0)                      # split ("parallel") index
    i = pl.program_id(1)                      # tile index within this split
    tile_idx = c * steps_per_split + i        # UNCLAMPED global tile index

    @pl.when(i == 0)
    def _init():
        acc_ref[...] = jnp.zeros_like(acc_ref)

    eps = jnp.float32(1e-07)
    one = jnp.float32(1.0)
    a = jnp.float32(alpha)
    n_chunks = rows_per_tile // chunk_rows

    def process(j):
        if isinstance(j, int):
            row0 = j * chunk_rows
        else:
            row0 = pl.multiple_of(j * chunk_rows, chunk_rows)

        x = preds_ref[:, pl.ds(row0, chunk_rows), :].astype(jnp.float32)
        t = labels_ref[pl.ds(row0, chunk_rows), :].astype(jnp.float32)

        # Softmax over the class axis (leading axis -> pure VPU reduction),
        # only the class-0 probability is needed.
        m = jnp.max(x, axis=0)                         # (CR, 128)
        e = jnp.exp(x - m[None, :, :])                 # (C, CR, 128)
        denom = jnp.sum(e, axis=0)                     # (CR, 128)
        if approx_reciprocal:
            p = e[0] * pl.reciprocal(denom, approx=True)
        else:
            p = e[0] / denom

        loss_1 = -a * _pow(one - p, gamma) * jnp.log(p + eps) * t
        loss_0 = (-(one - a) * _pow(p, gamma)
                  * jnp.log(one - p + eps) * (one - t))
        loss = loss_0 + loss_1                         # (CR, 128)

        base_row = tile_idx * rows_per_tile + row0     # traced scalar
        if may_need_mask:
            # Boundary / phantom chunks only: mask columns >= N.
            past_end = (base_row + chunk_rows) * 128 > n

            @pl.when(jnp.logical_not(past_end))
            def _acc_fast():
                acc_ref[...] += loss

            @pl.when(past_end)
            def _acc_masked():
                row_io = lax.broadcasted_iota(jnp.int32, (chunk_rows, 128), 0)
                lane_io = lax.broadcasted_iota(jnp.int32, (chunk_rows, 128), 1)
                col = (base_row + row_io) * 128 + lane_io
                acc_ref[...] += jnp.where(col < n, loss, jnp.float32(0.0))
        else:
            acc_ref[...] += loss

    if n_chunks == 1:
        process(0)
    else:
        lax.fori_loop(0, n_chunks,
                      lambda j, carry: (process(j), carry)[1], 0,
                      unroll=False)

    @pl.when(i == steps_per_split - 1)
    def _finalize():
        acc = acc_ref[...]
        # Pure element-wise vreg adds (each (8, 128) slab is one vreg).
        out_ref[...] = acc.reshape(chunk_rows // 8, 8, 128).sum(axis=0)


def focal_loss(preds, labels, alpha=0.25, gamma=2.0, *,
               approx_reciprocal=True,
               target_tile_bytes=2 * 1024 * 1024,
               num_splits=None):
    """preds: (N, C) float (any float dtype), labels: (N,).  Scalar f32 mean."""
    N, C = preds.shape
    itemsize = preds.dtype.itemsize
    G = -(-N // 128)                       # number of 128-column lane groups
    n_pad = G * 128

    # ---- tile geometry --------------------------------------------------
    # rows_per_tile "R" rows of 128 columns per grid step; ~2 MiB of preds per
    # step keeps the HBM stream near roofline while double-buffered inputs +
    # chunk-sized temporaries stay well inside the scoped VMEM limit on every
    # generation (incl. v7x's 64 MiB physical VMEM).
    r_raw = max(16, target_tile_bytes // (128 * C * itemsize))
    R = _round_up(min(r_raw, 4096, _round_up(G, 16)), 16)
    chunk_rows = max(cr for cr in (64, 32, 16) if R % cr == 0)
    num_tiles = -(-G // R)

    if num_splits is None:
        # 2-way split helps v7x (2 TCs); avoid a phantom-tile step penalty on
        # 1-TC chips for small odd tile counts.
        num_splits = 2 if (num_tiles >= 8 or
                           (num_tiles >= 2 and num_tiles % 2 == 0)) else 1
    num_splits = max(1, min(int(num_splits), num_tiles))
    steps_per_split = -(-num_tiles // num_splits)
    covered_cols = num_splits * steps_per_split * R * 128
    may_need_mask = covered_cols != N

    # ---- repack (one copy): pad to 128 lanes + transpose + free reshape --
    # The transpose is ~one extra HBM read+write of preds (see module note);
    # the <=127-column zero pad folds into that same copy.  No full-tile pad.
    preds_cn = preds.T                                  # (C, N)
    labels_row = labels.reshape(-1).astype(jnp.bfloat16)   # 0/1 exact in bf16
    if n_pad != N:
        preds_cn = jnp.pad(preds_cn, ((0, 0), (0, n_pad - N)))
        labels_row = jnp.pad(labels_row, (0, n_pad - N))
    preds_3d = preds_cn.reshape(C, G, 128)              # free (splits last dim)
    labels_2d = labels_row.reshape(G, 128)

    def preds_map(c, i):
        t = jnp.minimum(c * steps_per_split + i, num_tiles - 1)  # clamp phantom
        return (0, t, 0)

    def labels_map(c, i):
        t = jnp.minimum(c * steps_per_split + i, num_tiles - 1)
        return (t, 0)

    kernel = functools.partial(
        _focal_loss_kernel,
        alpha=float(alpha), gamma=float(gamma), n=N,
        rows_per_tile=R, chunk_rows=chunk_rows,
        steps_per_split=steps_per_split, may_need_mask=may_need_mask,
        approx_reciprocal=bool(approx_reciprocal))

    cost = pl.CostEstimate(
        flops=int(covered_cols * (3 * C + 20)),
        transcendentals=int(covered_cols * (C + 3)),
        bytes_accessed=int(preds_3d.size * itemsize + labels_2d.size * 2
                           + num_splits * 8 * 128 * 4),
    )

    partials = pl.pallas_call(
        kernel,
        out_shape=jax.ShapeDtypeStruct((num_splits * 8, 128), jnp.float32),
        grid_spec=pltpu.PrefetchScalarGridSpec(
            num_scalar_prefetch=0,
            grid=(num_splits, steps_per_split),
            in_specs=[
                pl.BlockSpec((C, R, 128), preds_map),
                pl.BlockSpec((R, 128), labels_map),
            ],
            out_specs=pl.BlockSpec((8, 128), lambda c, i: (c, 0)),
            scratch_shapes=[pltpu.VMEM((chunk_rows, 128), jnp.float32)],
        ),
        compiler_params=pltpu.CompilerParams(
            dimension_semantics=("parallel", "arbitrary"),
            vmem_limit_bytes=32 * 1024 * 1024,
        ),
        cost_estimate=cost,
    )(preds_3d, labels_2d)

    # Tiny cross-lane/cross-split reduction done once, outside the kernel.
    return jnp.sum(partials) / jnp.float32(N)


def focal_loss_ref(preds, labels, alpha=0.25, gamma=2.0):
    """Pure-JAX reference mirroring the PyTorch module."""
    eps = 1e-07
    sm = jax.nn.softmax(preds.astype(jnp.float32), axis=1)
    probs = sm[:, 0]
    labels = labels.astype(jnp.float32)
    loss_1 = (-1.0 * alpha * jnp.power(1.0 - probs, gamma)
              * jnp.log(probs + eps) * labels)
    loss_0 = (-1.0 * (1.0 - alpha) * jnp.power(probs, gamma)
              * jnp.log(1.0 - probs + eps) * (1.0 - labels))
    return jnp.mean(loss_0 + loss_1)


if __name__ == "__main__":
    key = jax.random.PRNGKey(0)
    k1, k2, k3, k4, k5, k6 = jax.random.split(key, 6)

    # Case 1: small (batch=8, classes=4), exact reciprocal, tight tolerance.
    N, C = 8, 4
    preds = jax.random.normal(k1, (N, C), dtype=jnp.float32)
    labels = jax.random.bernoulli(k2, 0.5, (N,)).astype(jnp.float32)
    loss = focal_loss(preds, labels, alpha=0.25, gamma=2.0,
                      approx_reciprocal=False)
    jax.block_until_ready(loss)
    ref = focal_loss_ref(preds, labels, alpha=0.25, gamma=2.0)
    assert jnp.allclose(loss, ref, atol=1e-5, rtol=1e-5), (loss, ref)

    # Case 2: ragged N (not a multiple of 128), bf16 preds kept bf16 across
    # the DMA, default approx-reciprocal path (loose tolerance).
    N2, C2 = 300, 4
    preds2 = jax.random.normal(k3, (N2, C2), dtype=jnp.float32).astype(jnp.bfloat16)
    labels2 = jax.random.bernoulli(k4, 0.5, (N2,)).astype(jnp.float32)
    loss2 = focal_loss(preds2, labels2, alpha=0.25, gamma=2.0)
    jax.block_until_ready(loss2)
    ref2 = focal_loss_ref(preds2, labels2, alpha=0.25, gamma=2.0)
    assert jnp.allclose(loss2, ref2, atol=1e-2, rtol=5e-2), (loss2, ref2)

    # Case 3: multi-tile grid + forced 2-way "parallel" split (odd tile count
    # -> one phantom, clamped + fully masked), ragged lane tail, exact recip.
    N3, C3 = 5000, 4
    preds3 = jax.random.normal(k5, (N3, C3), dtype=jnp.float32)
    labels3 = jax.random.bernoulli(k6, 0.5, (N3,)).astype(jnp.float32)
    loss3 = focal_loss(preds3, labels3, alpha=0.25, gamma=2.0,
                       target_tile_bytes=16 * 1024, num_splits=2,
                       approx_reciprocal=False)
    jax.block_until_ready(loss3)
    ref3 = focal_loss_ref(preds3, labels3, alpha=0.25, gamma=2.0)
    assert jnp.allclose(loss3, ref3, atol=1e-5, rtol=1e-4), (loss3, ref3)

    print("KERNEL_OK")
</pallas_src>

<mosaic_0001>
module attributes {stable_mosaic.version = 11 : i64} {
  func.func @_focal_loss_kernel(%arg0: i32, %arg1: i32, %arg2: memref<4x16x128xf32, #tpu.memory_space<vmem>>, %arg3: memref<16x128xbf16, #tpu.memory_space<vmem>>, %arg4: memref<8x128xf32, #tpu.memory_space<vmem>>, %arg5: memref<16x128xf32, #tpu.memory_space<vmem>>) attributes {dimension_semantics = [#tpu.dimension_semantics<parallel>, #tpu.dimension_semantics<arbitrary>], iteration_bounds = array<i64: 1, 1>, scalar_prefetch = 0 : i64, scratch_operands = 1 : i64, tpu.core_type = #tpu.core_type<tc>, window_params = [{transform_indices = @transform_0, window_bounds = array<i64: 4, 16, 128>}, {transform_indices = @transform_1, window_bounds = array<i64: 16, 128>}, {transform_indices = @transform_2, window_bounds = array<i64: 8, 128>}]} {
    %c1_i32 = arith.constant 1 : i32
    %0 = arith.muli %arg0, %c1_i32 : i32
    %1 = arith.addi %0, %arg1 : i32
    %c0_i32 = arith.constant 0 : i32
    %2 = arith.cmpi eq, %arg1, %c0_i32 : i32
    %3 = arith.extui %2 : i1 to i32
    %c0_i32_0 = arith.constant 0 : i32
    %4 = arith.cmpi ne, %3, %c0_i32_0 : i32
    scf.if %4 {
      %cst_22 = arith.constant 0.000000e+00 : f32
      %56 = vector.broadcast %cst_22 : f32 to vector<16x128xf32>
      %c0_23 = arith.constant 0 : index
      %c0_24 = arith.constant 0 : index
      %57 = vector.load %arg5[%c0_23, %c0_24] : memref<16x128xf32, #tpu.memory_space<vmem>>, vector<16x128xf32>
      tpu.vector_store %arg5[%c0_23, %c0_24], %56 {strides = array<i32>} : memref<16x128xf32, #tpu.memory_space<vmem>>, vector<16x128xf32>,
    } else {
    }
    %c0 = arith.constant 0 : index
    %c0_1 = arith.constant 0 : index
    %c0_2 = arith.constant 0 : index
    %5 = vector.load %arg2[%c0, %c0_1, %c0_2] : memref<4x16x128xf32, #tpu.memory_space<vmem>>, vector<4x16x128xf32>
    %c0_3 = arith.constant 0 : index
    %c0_4 = arith.constant 0 : index
    %6 = vector.load %arg3[%c0_3, %c0_4] : memref<16x128xbf16, #tpu.memory_space<vmem>>, vector<16x128xbf16>
    %7 = arith.extf %6 : vector<16x128xbf16> to vector<16x128xf32>
    %cst = arith.constant dense<0xFF800000> : vector<16x128xf32>
    %8 = vector.multi_reduction <maximumf>, %5, %cst [0] : vector<4x16x128xf32> to vector<16x128xf32>
    %9 = vector.shape_cast %8 : vector<16x128xf32> to vector<1x16x128xf32>
    %10 = vector.broadcast %9 : vector<1x16x128xf32> to vector<4x16x128xf32>
    %11 = arith.subf %5, %10 : vector<4x16x128xf32>
    %12 = math.exp %11 : vector<4x16x128xf32>
    %cst_5 = arith.constant dense<0.000000e+00> : vector<16x128xf32>
    %13 = vector.multi_reduction <add>, %12, %cst_5 [0] : vector<4x16x128xf32> to vector<16x128xf32>
    %14 = vector.extract_strided_slice %12 {offsets = [0, 0, 0], sizes = [1, 16, 128], strides = [1, 1, 1]} : vector<4x16x128xf32> to vector<1x16x128xf32>
    %15 = vector.shape_cast %14 : vector<1x16x128xf32> to vector<16x128xf32>
    %16 = arith.divf %15, %13 : vector<16x128xf32>
    %cst_6 = arith.constant 0.000000e+00 : f32
    %cst_7 = arith.constant 2.500000e-01 : f32
    %17 = arith.subf %cst_6, %cst_7 : f32
    %cst_8 = arith.constant 1.000000e+00 : f32
    %18 = vector.broadcast %cst_8 : f32 to vector<16x128xf32>
    %19 = arith.subf %18, %16 : vector<16x128xf32>
    %20 = arith.mulf %19, %19 : vector<16x128xf32>
    %21 = vector.broadcast %17 : f32 to vector<16x128xf32>
    %22 = arith.mulf %21, %20 : vector<16x128xf32>
    %cst_9 = arith.constant 1.000000e-07 : f32
    %23 = vector.broadcast %cst_9 : f32 to vector<16x128xf32>
    %24 = arith.addf %16, %23 : vector<16x128xf32>
    %25 = math.log %24 : vector<16x128xf32>
    %26 = arith.mulf %22, %25 : vector<16x128xf32>
    %27 = arith.mulf %26, %7 : vector<16x128xf32>
    %cst_10 = arith.constant 1.000000e+00 : f32
    %cst_11 = arith.constant 2.500000e-01 : f32
    %28 = arith.subf %cst_10, %cst_11 : f32
    %cst_12 = arith.constant 0.000000e+00 : f32
    %29 = arith.subf %cst_12, %28 : f32
    %30 = arith.mulf %16, %16 : vector<16x128xf32>
    %31 = vector.broadcast %29 : f32 to vector<16x128xf32>
    %32 = arith.mulf %31, %30 : vector<16x128xf32>
    %cst_13 = arith.constant 1.000000e+00 : f32
    %33 = vector.broadcast %cst_13 : f32 to vector<16x128xf32>
    %34 = arith.subf %33, %16 : vector<16x128xf32>
    %cst_14 = arith.constant 1.000000e-07 : f32
    %35 = vector.broadcast %cst_14 : f32 to vector<16x128xf32>
    %36 = arith.addf %34, %35 : vector<16x128xf32>
    %37 = math.log %36 : vector<16x128xf32>
    %38 = arith.mulf %32, %37 : vector<16x128xf32>
    %cst_15 = arith.constant 1.000000e+00 : f32
    %39 = vector.broadcast %cst_15 : f32 to vector<16x128xf32>
    %40 = arith.subf %39, %7 : vector<16x128xf32>
    %41 = arith.mulf %38, %40 : vector<16x128xf32>
    %42 = arith.addf %41, %27 : vector<16x128xf32>
    %c16_i32 = arith.constant 16 : i32
    %43 = arith.muli %1, %c16_i32 : i32
    %c0_i32_16 = arith.constant 0 : i32
    %44 = arith.addi %43, %c0_i32_16 : i32
    %c16_i32_17 = arith.constant 16 : i32
    %45 = arith.addi %44, %c16_i32_17 : i32
    %c128_i32 = arith.constant 128 : i32
    %46 = arith.muli %45, %c128_i32 : i32
    %c8_i32 = arith.constant 8 : i32
    %47 = arith.cmpi sgt, %46, %c8_i32 : i32
    %true = arith.constant true
    %48 = arith.xori %47, %true : i1
    %49 = arith.extui %48 : i1 to i32
    %c0_i32_18 = arith.constant 0 : i32
    %50 = arith.cmpi ne, %49, %c0_i32_18 : i32
    scf.if %50 {
      %c0_22 = arith.constant 0 : index
      %c0_23 = arith.constant 0 : index
      %56 = vector.load %arg5[%c0_22, %c0_23] : memref<16x128xf32, #tpu.memory_space<vmem>>, vector<16x128xf32>
      %57 = arith.addf %56, %42 : vector<16x128xf32>
      %c0_24 = arith.constant 0 : index
      %c0_25 = arith.constant 0 : index
      %58 = vector.load %arg5[%c0_24, %c0_25] : memref<16x128xf32, #tpu.memory_space<vmem>>, vector<16x128xf32>
      tpu.vector_store %arg5[%c0_24, %c0_25], %57 {strides = array<i32>} : memref<16x128xf32, #tpu.memory_space<vmem>>, vector<16x128xf32>,
    } else {
    }
    %51 = arith.extui %47 : i1 to i32
    %c0_i32_19 = arith.constant 0 : i32
    %52 = arith.cmpi ne, %51, %c0_i32_19 : i32
    scf.if %52 {
      %56 = tpu.iota {dimensions = array<i32: 0>} : vector<16x128xi32>
      %57 = tpu.iota {dimensions = array<i32: 1>} : vector<16x128xi32>
      %58 = vector.broadcast %44 : i32 to vector<16x128xi32>
      %59 = arith.addi %58, %56 : vector<16x128xi32>
      %c128_i32_22 = arith.constant 128 : i32
      %60 = vector.broadcast %c128_i32_22 : i32 to vector<16x128xi32>
      %61 = arith.muli %59, %60 : vector<16x128xi32>
      %62 = arith.addi %61, %57 : vector<16x128xi32>
      %c0_23 = arith.constant 0 : index
      %c0_24 = arith.constant 0 : index
      %63 = vector.load %arg5[%c0_23, %c0_24] : memref<16x128xf32, #tpu.memory_space<vmem>>, vector<16x128xf32>
      %c8_i32_25 = arith.constant 8 : i32
      %64 = vector.broadcast %c8_i32_25 : i32 to vector<16x128xi32>
      %65 = arith.cmpi slt, %62, %64 : vector<16x128xi32>
      %cst_26 = arith.constant 0.000000e+00 : f32
      %66 = vector.broadcast %cst_26 : f32 to vector<16x128xf32>
      %67 = arith.select %65, %42, %66 : vector<16x128xi1>, vector<16x128xf32>
      %68 = arith.addf %63, %67 : vector<16x128xf32>
      %c0_27 = arith.constant 0 : index
      %c0_28 = arith.constant 0 : index
      %69 = vector.load %arg5[%c0_27, %c0_28] : memref<16x128xf32, #tpu.memory_space<vmem>>, vector<16x128xf32>
      tpu.vector_store %arg5[%c0_27, %c0_28], %68 {strides = array<i32>} : memref<16x128xf32, #tpu.memory_space<vmem>>, vector<16x128xf32>,
    } else {
    }
    %c0_i32_20 = arith.constant 0 : i32
    %53 = arith.cmpi eq, %arg1, %c0_i32_20 : i32
    %54 = arith.extui %53 : i1 to i32
    %c0_i32_21 = arith.constant 0 : i32
    %55 = arith.cmpi ne, %54, %c0_i32_21 : i32
    scf.if %55 {
      %c0_22 = arith.constant 0 : index
      %c0_23 = arith.constant 0 : index
      %56 = vector.load %arg5[%c0_22, %c0_23] : memref<16x128xf32, #tpu.memory_space<vmem>>, vector<16x128xf32>
      %57 = vector.shape_cast %56 : vector<16x128xf32> to vector<2x8x128xf32>
      %cst_24 = arith.constant dense<0.000000e+00> : vector<8x128xf32>
      %58 = vector.multi_reduction <add>, %57, %cst_24 [0] : vector<2x8x128xf32> to vector<8x128xf32>
      %c0_25 = arith.constant 0 : index
      %c0_26 = arith.constant 0 : index
      %59 = vector.load %arg4[%c0_25, %c0_26] : memref<8x128xf32, #tpu.memory_space<vmem>>, vector<8x128xf32>
      tpu.vector_store %arg4[%c0_25, %c0_26], %58 {strides = array<i32>} : memref<8x128xf32, #tpu.memory_space<vmem>>, vector<8x128xf32>,
    } else {
    }
    return
  }
  func.func @transform_0(%arg0: i32, %arg1: i32) -> (i32, i32, i32) {
    %c1_i32 = arith.constant 1 : i32
    %0 = arith.muli %arg0, %c1_i32 : i32
    %1 = arith.addi %0, %arg1 : i32
    %c0_i32 = arith.constant 0 : i32
    %2 = arith.minsi %1, %c0_i32 : i32
    %c0_i32_0 = arith.constant 0 : i32
    %c0_i32_1 = arith.constant 0 : i32
    %c0_i32_2 = arith.constant 0 : i32
    return %c0_i32_0, %2, %c0_i32_1 : i32, i32, i32
  }
  func.func @transform_1(%arg0: i32, %arg1: i32) -> (i32, i32) {
    %c1_i32 = arith.constant 1 : i32
    %0 = arith.muli %arg0, %c1_i32 : i32
    %1 = arith.addi %0, %arg1 : i32
    %c0_i32 = arith.constant 0 : i32
    %2 = arith.minsi %1, %c0_i32 : i32
    %c0_i32_0 = arith.constant 0 : i32
    %c0_i32_1 = arith.constant 0 : i32
    return %2, %c0_i32_0 : i32, i32
  }
  func.func @transform_2(%arg0: i32, %arg1: i32) -> (i32, i32) {
    %c0_i32 = arith.constant 0 : i32
    %c0_i32_0 = arith.constant 0 : i32
    return %arg0, %c0_i32 : i32, i32
  }
}

</mosaic_0001>

<llo_original>
// kernel: tpu_custom_call.1
$region0: #{tpu_custom_call.1}
  #allocation0 [shape = 'u32[]', space=smem, size = 0x4, offset = 0x4, fixed_abs, tag = 'smem constant byte address 0x4 - core index']
  #allocation1 [shape = 'u32[144,128]{1,0:T(1,128)}', space=vmem, size = 0x12000, scoped, tag = 'internal scratch']
  #allocation2 [shape = 'f32[16,128]{1,0:T(8,128)}', space=vmem, size = 0x2000, scoped, tag = 'scratch operand']
  #allocation7 [shape = 's32[]', space=sflag, size = 0x4, offset = 0, fixed_abs, tag = 'sflag constant byte address 0x0 - dummy sync flag']
  %s0 = inlined_call_operand.hbm [shape: f32[4,1,128], index: 0, kind: input, shape index: {}]
  %s1 = inlined_call_operand.vmem [shape: bf16[1,128], index: 1, kind: input, shape index: {}]
  %s2 = inlined_call_operand.hbm [shape: f32[8,128], index: 2, kind: output, shape index: {}]
  %s3 = sld [smem:[#allocation0]]
  $region38: #{tpu_custom_call.1} parent=0
    _
  %s5 = ssub.s32 1, %s3
  %s6 = scalar_select 0, %s5, %s3
  $region1: #{tpu_custom_call.1} parent=0
    #allocation3 [shape = 'u8[32768]{0}', space=vmem, size = 0x8000, scoped, tag = 'input window, operand 0, single buffered']
    #allocation4 [shape = 's32[1]{0}', space=sflag, size = 0x4, scoped, tag = 'scoped memory for tpu_custom_call.1']
    #allocation5 [shape = 's32[1]{0}', space=sflag, size = 0x4, scoped, tag = 'scoped memory for tpu_custom_call.1']
    #allocation6 [shape = 'u8[4096]{0}', space=vmem, size = 0x1000, scoped, tag = 'output window, operand 0, single buffered']
    %7 = vsyncpa [#allocation4], 0
    %8 = vsyncpa [#allocation5], 0
    // Predicated region
    $region2: #{tpu_custom_call.1} parent=1 // pred_check
      _
    $region3: #{tpu_custom_call.1} parent=1 // pred_check_branch
      %10 = sbr.rel (0) target = $region5
    $region4: #{tpu_custom_call.1} parent=1 // pred_region
      #allocation8 [shape = 'u32[6]{0}', space=smem, size = 0x18, scoped, tag = 'DMA stride descriptor']
      %s11 = sadd.s32 0, 0
      %p12 = scmp.lt.s32.totalorder %s11, 0
      %s13 = scalar_select %p12, %s11, 0
      %s14 = smul.u32 16, %s13
      %s15 = ssub.s32 1, %s14
      %s16 = smul.u32 64, %s15
      %s18 = ssub.s32 1024, %s16
      %19 = vsyncadd [#allocation4], %s18
      %p20 = scmp.ne.s32.totalorder 0, %s16
      %s21 = smul.addr %s14, 16
      %s22 = scalar_lea.hbm %s0, %s21
      %s23 = smul.u32 %s15, 4
      %s25 = sshll.u32 1, 14
      %s26 = sxor.u32 4294967295, %s25
      %s28 = sld [smem:[#allocation0]]
      %s29 = sadd.s32 2, %s28
      %s31 = sshll.u32 7, 26
      %s32 = sxor.u32 4294967295, %s31
      %s33 = sand.u32 0, %s32
      %s34 = sshll.u32 %s29, 26
      %s35 = sor.u32 %s33, %s34
      %s36 = sshll.u32 [#allocation3], 4
      %s37 = int_to_ptr.vmem [resolvable:$true] %s36
      %s38 = sshll.u32 %s23, 4
      %43 = sst [smem:[#allocation8]] 16
      %s44 = scalar_lea.smem [#allocation8], 1
      %45 = sst [smem:[%s44]] 256
      %s46 = scalar_lea.smem [#allocation8], 2
      %47 = sst [smem:[%s46]] %s15
      %s48 = scalar_lea.smem [#allocation8], 3
      %49 = sst [smem:[%s48]] 16
      %s50 = scalar_lea.smem [#allocation8], 4
      %51 = sst [smem:[%s50]] 16
      %s52 = scalar_lea.smem [#allocation8], 5
      %53 = sst [smem:[%s52]] 1
      %55 = dma.general (%p20), %s22, %s38, %s37, [#allocation4], 131072, [#allocation8], %s35, 0
    $region5: #{tpu_custom_call.1} parent=1 // pred_fallthru
      _
    // Predicated region
    $region6: #{tpu_custom_call.1} parent=1 // pred_check
      _
    $region7: #{tpu_custom_call.1} parent=1 // pred_check_branch
      %57 = sbr.rel (0) target = $region9
    $region8: #{tpu_custom_call.1} parent=1 // pred_region
      %s58 = sadd.s32 0, 0
      %p59 = scmp.lt.s32.totalorder %s58, 0
      %s60 = scalar_select %p59, %s58, 0
      %s61 = smul.u32 8, %s60
      %s62 = ssub.s32 1, %s61
      %s63 = smul.u32 16, %s62
      %p64 = scmp.lt.s32.totalorder %s61, 0
      %s65 = scalar_select %p64, %s61, 0
      %s66 = scalar_lea.vmem %s1, %s65
      %s67 = sadd.s32 0, 0
      %p68 = scmp.lt.s32.totalorder %s67, 0
      %s69 = scalar_select %p68, %s67, 0
      %s70 = smul.u32 8, %s69
      %s71 = ssub.s32 1, %s70
      %s72 = smul.u32 16, %s71
    $region9: #{tpu_custom_call.1} parent=1 // pred_fallthru
      _
    // Predicated region
    $region10: #{tpu_custom_call.1} parent=1 // pred_check
      _
    $region11: #{tpu_custom_call.1} parent=1 // pred_check_branch
      %74 = sbr.rel (0) target = $region13
    $region12: #{tpu_custom_call.1} parent=1 // pred_region
      %75 = dma.done [#allocation4], 1024
    $region13: #{tpu_custom_call.1} parent=1 // pred_fallthru
      _
    %s76 = sadd.s32 0, 0
    %p77 = scmp.lt.s32.totalorder %s76, 0
    %s78 = scalar_select %p77, %s76, 0
    %s79 = smul.u32 8, %s78
    %s80 = ssub.s32 1, %s79
    %s81 = smul.u32 16, %s80
    %p82 = scmp.lt.s32.totalorder %s79, 0
    %s83 = scalar_select %p82, %s79, 0
    %s84 = scalar_lea.vmem %s1, %s83
    %s85 = sadd.s32 0, 0
    %p86 = scmp.lt.s32.totalorder %s85, 0
    %s87 = scalar_select %p86, %s85, 0
    %s88 = smul.u32 16, %s87
    %s89 = ssub.s32 1, %s88
    %s90 = smul.u32 64, %s89
    %s91 = sadd.s32 0, 0
    %p92 = scmp.lt.s32.totalorder %s91, 0
    %s93 = scalar_select %p92, %s91, 0
    %s94 = smul.u32 8, %s93
    %s95 = ssub.s32 1, %s94
    %s96 = smul.u32 16, %s95
    %p97 = scmp.lt.s32.totalorder %s94, 0
    %s98 = scalar_select %p97, %s94, 0
    %s99 = scalar_lea.vmem %s1, %s98
    %s100 = sadd.s32 0, 0
    %p101 = scmp.lt.s32.totalorder %s100, 0
    %s102 = scalar_select %p101, %s100, 0
    %s103 = smul.u32 8, %s102
    %s104 = ssub.s32 1, %s103
    %s105 = smul.u32 16, %s104
    %s106 = sadd.s32 0, 0
    %p107 = scmp.eq.s32.totalorder 0, 0
    // Predicated region
    $region14: #{tpu_custom_call.1} parent=1 // pred_check
      %p108 = pneg %p107
    $region15: #{tpu_custom_call.1} parent=1 // pred_check_branch
      %110 = sbr.rel (%p108) target = $region17
    $region16: #{tpu_custom_call.1} parent=1 // pred_region
      %111 = vst [vmem:[#allocation2] sm:$0xff] 0.0
      %112 = vst [vmem:[#allocation2 + $0x8] sm:$0xff] 0.0
    $region17: #{tpu_custom_call.1} parent=1 // pred_fallthru
      _
    %v113 = vld [vmem:[#allocation3] sm:$0xff]
    %v114 = vld [vmem:[#allocation3 + $0x8] sm:$0xff]
    %v115 = vld [vmem:[#allocation3 + $0x10] sm:$0xff]
    %v116 = vld [vmem:[#allocation3 + $0x18] sm:$0xff]
    %v117 = vld [vmem:[#allocation3 + $0x20] sm:$0xff]
    %v118 = vld [vmem:[#allocation3 + $0x28] sm:$0xff]
    %v119 = vld [vmem:[#allocation3 + $0x30] sm:$0xff]
    %v120 = vld [vmem:[#allocation3 + $0x38] sm:$0xff]
    %v121 = vld [vmem:[%s99] sm:$0x1]
    %v122 = vld [vmem:[%s99 + $0x1] sm:$0x1]
    %v123 = vld [vmem:[%s99 + $0x2] sm:$0x1]
    %v124 = vld [vmem:[%s99 + $0x3] sm:$0x1]
    %v125 = vld [vmem:[%s99 + $0x4] sm:$0x1]
    %v126 = vld [vmem:[%s99 + $0x5] sm:$0x1]
    %v127 = vld [vmem:[%s99 + $0x6] sm:$0x1]
    %v128 = vld [vmem:[%s99 + $0x7] sm:$0x1]
    %v129 = vunpack.c.l.bf16 %v121
    %v130 = vunpack.c.l.bf16 %v122
    %v131 = vunpack.c.l.bf16 %v123
    %v132 = vunpack.c.l.bf16 %v124
    %v133 = vunpack.c.l.bf16 %v125
    %v134 = vunpack.c.l.bf16 %v126
    %v135 = vunpack.c.l.bf16 %v127
    %v136 = vunpack.c.l.bf16 %v128
    %v137 = vmax.f32 %v113, %v117
    %v138 = vmax.f32 %v115, %v119
    %v139 = vmax.f32 %v137, %v138
    %v140 = vmax.f32 %v114, %v118
    %v141 = vmax.f32 %v116, %v120
    %v142 = vmax.f32 %v140, %v141
    %v143 = vsub.f32 %v113, %v139
    %v144 = vsub.f32 %v114, %v142
    %v145 = vsub.f32 %v115, %v139
    %v146 = vsub.f32 %v116, %v142
    %v147 = vsub.f32 %v117, %v139
    %v148 = vsub.f32 %v118, %v142
    %v149 = vsub.f32 %v119, %v139
    %v150 = vsub.f32 %v120, %v142
    %v151 = vmul.f32 %v143, 1.442695
    %v152 = vpow.pop %v151
    %v153 = vmul.f32 %v144, 1.442695
    %v154 = vpow.pop %v153
    %v155 = vmul.f32 %v145, 1.442695
    %v156 = vpow.pop %v155
    %v157 = vmul.f32 %v146, 1.442695
    %v158 = vpow.pop %v157
    %v159 = vmul.f32 %v147, 1.442695
    %v160 = vpow.pop %v159
    %v161 = vmul.f32 %v148, 1.442695
    %v162 = vpow.pop %v161
    %v163 = vmul.f32 %v149, 1.442695
    %v164 = vpow.pop %v163
    %v165 = vmul.f32 %v150, 1.442695
    %v166 = vpow.pop %v165
    %v167 = vadd.f32 %v152, %v156
    %v168 = vadd.f32 %v167, %v160
    %v169 = vadd.f32 %v168, %v164
    %v170 = vadd.f32 %v154, %v158
    %v171 = vadd.f32 %v170, %v162
    %v172 = vadd.f32 %v171, %v166
    %v173 = vrcp.pop %v169
    %v174 = vmul.f32 %v152, %v173
    %v175 = vrcp.pop %v172
    %v176 = vmul.f32 %v154, %v175
    %v177 = vsub.f32 1.0, %v174
    %v178 = vsub.f32 1.0, %v176
    %v179 = vmul.f32 %v177, %v177
    %v180 = vmul.f32 %v178, %v178
    %v181 = vmul.f32 %v179, -0.25
    %v182 = vmul.f32 %v180, -0.25
    %v183 = vadd.f32 %v174, 1e-07
    %v184 = vadd.f32 %v176, 1e-07
    %v185 = vlog2.pop %v183
    %v186 = vmul.f32 %v185, 0.6931472
    %v187 = vlog2.pop %v184
    %v188 = vmul.f32 %v187, 0.6931472
    %v189 = vmul.f32 %v181, %v186
    %v190 = vmul.f32 %v182, %v188
    %v199 = vcombine.low %v129, %v130
    %v200 = vcombine.low %v131, %v132
    %v202 = vunpack.c.l.s4 1983009808
    %v203 = vunpack.c.0.s8 %v202
    %v204 = vlaneseq
    %v205 = vshrl.u32 %v204, 7
    %v206 = vsub.s32 %v203, %v205
    %v207 = vrot.slane %v199, %v206
    %v209 = vunpack.c.l.s4 1983009808
    %v210 = vunpack.c.0.s8 %v209
    %v211 = vlaneseq
    %v212 = vshrl.u32 %v211, 7
    %v213 = vsub.s32 %v210, %v212
    %v214 = vrot.slane %v200, %v213
    %v215 = vcombine.low %v207, %v214
    %v216 = vcombine.low %v133, %v134
    %v217 = vcombine.low %v135, %v136
    %v219 = vunpack.c.l.s4 1983009808
    %v220 = vunpack.c.0.s8 %v219
    %v221 = vlaneseq
    %v222 = vshrl.u32 %v221, 7
    %v223 = vsub.s32 %v220, %v222
    %v224 = vrot.slane %v216, %v223
    %v226 = vunpack.c.l.s4 1983009808
    %v227 = vunpack.c.0.s8 %v226
    %v228 = vlaneseq
    %v229 = vshrl.u32 %v228, 7
    %v230 = vsub.s32 %v227, %v229
    %v231 = vrot.slane %v217, %v230
    %v232 = vcombine.low %v224, %v231
    %v235 = vmul.f32 %v189, %v215
    %v236 = vmul.f32 %v190, %v232
    %v237 = vmul.f32 %v174, %v174
    %v238 = vmul.f32 %v176, %v176
    %v239 = vmul.f32 %v237, -0.75
    %v240 = vmul.f32 %v238, -0.75
    %v241 = vadd.f32 %v177, 1e-07
    %v242 = vadd.f32 %v178, 1e-07
    %v243 = vlog2.pop %v241
    %v244 = vmul.f32 %v243, 0.6931472
    %v245 = vlog2.pop %v242
    %v246 = vmul.f32 %v245, 0.6931472
    %v247 = vmul.f32 %v239, %v244
    %v248 = vmul.f32 %v240, %v246
    %v249 = vsub.f32 1.0, %v129
    %v250 = vsub.f32 1.0, %v130
    %v251 = vsub.f32 1.0, %v131
    %v252 = vsub.f32 1.0, %v132
    %v253 = vsub.f32 1.0, %v133
    %v254 = vsub.f32 1.0, %v134
    %v255 = vsub.f32 1.0, %v135
    %v256 = vsub.f32 1.0, %v136
    %v265 = vcombine.low %v249, %v250
    %v266 = vcombine.low %v251, %v252
    %v268 = vunpack.c.l.s4 1983009808
    %v269 = vunpack.c.0.s8 %v268
    %v270 = vlaneseq
    %v271 = vshrl.u32 %v270, 7
    %v272 = vsub.s32 %v269, %v271
    %v273 = vrot.slane %v265, %v272
    %v275 = vunpack.c.l.s4 1983009808
    %v276 = vunpack.c.0.s8 %v275
    %v277 = vlaneseq
    %v278 = vshrl.u32 %v277, 7
    %v279 = vsub.s32 %v276, %v278
    %v280 = vrot.slane %v266, %v279
    %v281 = vcombine.low %v273, %v280
    %v282 = vcombine.low %v253, %v254
    %v283 = vcombine.low %v255, %v256
    %v285 = vunpack.c.l.s4 1983009808
    %v286 = vunpack.c.0.s8 %v285
    %v287 = vlaneseq
    %v288 = vshrl.u32 %v287, 7
    %v289 = vsub.s32 %v286, %v288
    %v290 = vrot.slane %v282, %v289
    %v292 = vunpack.c.l.s4 1983009808
    %v293 = vunpack.c.0.s8 %v292
    %v294 = vlaneseq
    %v295 = vshrl.u32 %v294, 7
    %v296 = vsub.s32 %v293, %v295
    %v297 = vrot.slane %v283, %v296
    %v298 = vcombine.low %v290, %v297
    %v301 = vmul.f32 %v247, %v281
    %v302 = vmul.f32 %v248, %v298
    %v303 = vadd.f32 %v301, %v235
    %v304 = vadd.f32 %v302, %v236
    %s305 = smul.u32 %s106, 16
    %s306 = sadd.s32 %s305, 16
    %s307 = smul.u32 %s306, 128
    %p308 = scmp.gt.s32.totalorder %s307, 8
    %p309 = scmp.le.s32.totalorder %s307, 8
    // Predicated region
    $region18: #{tpu_custom_call.1} parent=1 // pred_check
      %p310 = pneg %p309
    $region19: #{tpu_custom_call.1} parent=1 // pred_check_branch
      %312 = sbr.rel (%p310) target = $region21
    $region20: #{tpu_custom_call.1} parent=1 // pred_region
      %v313 = vld [vmem:[#allocation2] sm:$0xff]
      %v314 = vld [vmem:[#allocation2 + $0x8] sm:$0xff]
      %v315 = vadd.f32 %v313, %v303
      %v316 = vadd.f32 %v314, %v304
      %317 = vst [vmem:[#allocation2] sm:$0xff] %v315
      %318 = vst [vmem:[#allocation2 + $0x8] sm:$0xff] %v316
    $region21: #{tpu_custom_call.1} parent=1 // pred_fallthru
      _
    // Predicated region
    $region22: #{tpu_custom_call.1} parent=1 // pred_check
      %p319 = pneg %p308
    $region23: #{tpu_custom_call.1} parent=1 // pred_check_branch
      %321 = sbr.rel (%p319) target = $region25
    $region24: #{tpu_custom_call.1} parent=1 // pred_region
      %v322 = vlaneseq
      %v323 = vshrl.u32 %v322, 7
      %v324 = vadd.s32 %v323, 8
      %v325 = vlaneseq
      %v326 = vand.u32 %v325, 127
      %v327 = vstv %s305
      %v328 = vadd.s32 %v327, %v323
      %v329 = vadd.s32 %v327, %v324
      %v330 = vmul.u32 %v328, 128
      %v331 = vmul.u32 %v329, 128
      %v332 = vadd.s32 %v330, %v326
      %v333 = vadd.s32 %v331, %v326
      %v334 = vld [vmem:[#allocation2] sm:$0xff]
      %v335 = vld [vmem:[#allocation2 + $0x8] sm:$0xff]
      %vm336 = vcmp.lt.s32.totalorder %v332, 8
      %vm337 = vcmp.lt.s32.totalorder %v333, 8
      %v338 = vsel %vm336, %v303, 0.0
      %v339 = vsel %vm337, %v304, 0.0
      %v340 = vadd.f32 %v334, %v338
      %v341 = vadd.f32 %v335, %v339
      %342 = vst [vmem:[#allocation2] sm:$0xff] %v340
      %343 = vst [vmem:[#allocation2 + $0x8] sm:$0xff] %v341
    $region25: #{tpu_custom_call.1} parent=1 // pred_fallthru
      _
    // Predicated region
    $region26: #{tpu_custom_call.1} parent=1 // pred_check
      %p344 = pneg %p107
    $region27: #{tpu_custom_call.1} parent=1 // pred_check_branch
      %346 = sbr.rel (%p344) target = $region29
    $region28: #{tpu_custom_call.1} parent=1 // pred_region
      %v347 = vld [vmem:[#allocation2] sm:$0xff]
      %v348 = vld [vmem:[#allocation2 + $0x8] sm:$0xff]
      %v349 = vadd.f32 %v347, %v348
      %350 = vst [vmem:[#allocation6] sm:$0xff] %v349
    $region29: #{tpu_custom_call.1} parent=1 // pred_fallthru
      _
    // Predicated region
    $region30: #{tpu_custom_call.1} parent=1 // pred_check
      _
    $region31: #{tpu_custom_call.1} parent=1 // pred_check_branch
      %352 = sbr.rel (0) target = $region33
    $region32: #{tpu_custom_call.1} parent=1 // pred_region
      %s354 = ssub.s32 128, 128
      %355 = vsyncadd [#allocation5], %s354
      %s357 = sshll.u32 [#allocation6], 4
      %s358 = int_to_ptr.vmem [resolvable:$true] %s357
      %360 = dma.vmem_to_hbm [thread:$0]  %s358, 128, %s2, [#allocation5]
    $region33: #{tpu_custom_call.1} parent=1 // pred_fallthru
      _
    // Predicated region
    $region34: #{tpu_custom_call.1} parent=1 // pred_check
      _
    $region35: #{tpu_custom_call.1} parent=1 // pred_check_branch
      %362 = sbr.rel (0) target = $region37
    $region36: #{tpu_custom_call.1} parent=1 // pred_region
      %363 = dma.done [#allocation5], 128
    $region37: #{tpu_custom_call.1} parent=1 // pred_fallthru
      _
    %364 = vsyncpa [#allocation4], 1
    %365 = vsyncpa [#allocation5], 1

</llo_original>
